<compile_context>
chip_gen: v5e
topology: v5e:2x2
jax: 0.10.0
libtpu: 0.0.40
codegen_flags: <defaults>
</compile_context>

<pallas_src>
import functools

import jax
import jax.numpy as jnp
from jax.experimental import pallas as pl
from jax.experimental.pallas import tpu as pltpu


def _deconv_relu_up_kernel(x_ref, w_ref, b_ref, o_ref, xpad_ref, *,
                           H, W, Cin, Cout, K, TH):
    # x_ref:    (1, Cin, H, W)          raw NCHW input for this batch element
    # w_ref:    (K, Cin*W, W*Cout)      banded (block-Toeplitz) conv weights
    # b_ref:    (1, W*Cout)             bias tiled along the lane axis
    # o_ref:    (1, 2, 2, TH, W*Cout)   phase-major upsampled output tile
    # xpad_ref: (H+2, Cin*W)            lane-packed, H-zero-padded input (persistent scratch)
    t = pl.program_id(1)

    # Build the lane-packed, H-padded input once per batch element (t == 0); it stays
    # resident in VMEM for the remaining H-tiles of the same n (t axis is "arbitrary",
    # so all t steps of a given n run sequentially on the same core).
    @pl.when(t == 0)
    def _():
        xpad_ref[...] = jnp.zeros_like(xpad_ref)
        for ci in range(Cin):
            xpad_ref[pl.ds(1, H), pl.ds(ci * W, W)] = x_ref[0, ci, :, :]

    r0 = pl.multiple_of(t * TH, TH)
    acc = jnp.zeros((TH, W * Cout), jnp.float32)
    # K row-shifted matmuls; the kw taps and W-padding are folded into w_ref's band
    # structure, so each matmul is a dense (TH, W*Cin) @ (W*Cin, W*Cout) MXU op with a
    # fully lane-dense (TH, 128) result.
    for kh in range(K):
        acc = acc + jnp.dot(xpad_ref[pl.ds(r0 + kh, TH), :], w_ref[kh],
                            preferred_element_type=jnp.float32)

    y = jnp.maximum(acc + b_ref[...], 0.0).astype(o_ref.dtype)   # bias + ReLU

    # Nearest 2x upsample: four contiguous full-width stores (phase-major layout).
    for a in range(2):
        for b in range(2):
            o_ref[0, a, b, :, :] = y


def _banded_weights(w_deconv, W):
    """(Cin, Cout, K, K) ConvTranspose2d weight -> (K, Cin*W, W*Cout) band matrices.

    w_mat[kh, ci*W + c, w*Cout + co] = w_conv[kh, c - w + 1, ci, co] if the tap is in
    range else 0, where w_conv is the flipped / (in,out)-swapped deconv weight.  The
    zero entries implement the W-direction padding.
    """
    Cin, Cout, K, _ = w_deconv.shape
    # ConvTranspose2d(stride=1, pad=1, k=3) == ordinary cross-correlation with the
    # spatially flipped, (in,out)-swapped weight and padding 1.
    w_conv = jnp.transpose(w_deconv[:, :, ::-1, ::-1], (2, 3, 0, 1))   # (K, K, Cin, Cout)
    c = jnp.arange(W)                       # input column
    w = jnp.arange(W)                       # output column
    kw = c[:, None] - w[None, :] + 1        # (W, W); valid taps: 0 <= kw < K
    valid = (kw >= 0) & (kw < K)
    band = w_conv[:, jnp.clip(kw, 0, K - 1)]                           # (K, W, W, Cin, Cout)
    band = jnp.where(valid[None, :, :, None, None], band, 0.0)
    band = jnp.transpose(band, (0, 3, 1, 2, 4))                        # (K, Cin, Wc, Ww, Cout)
    return band.reshape(K, Cin * W, W * Cout)


def deconv_layer_forward(x_nchw, w_deconv, bias):
    """Forward pass of DeConvLayer.

    x_nchw:   (N, Cin, H, W)      float32
    w_deconv: (Cin, Cout, K, K)   ConvTranspose2d weight (PyTorch layout)
    bias:     (Cout,)
    returns:  (N, Cout, 2H, 2W)   float32 (NCHW, like PyTorch)
    """
    N, Cin, H, W = x_nchw.shape
    Cout, K = w_deconv.shape[1], w_deconv.shape[2]
    TH = 8 if H % 8 == 0 else H      # H-tile (bounds VMEM; >= 2 steps/core on v7x)
    T = H // TH

    w_mat = _banded_weights(w_deconv, W)             # (K, Cin*W, W*Cout), tiny, once
    b_row = jnp.tile(bias, W).reshape(1, W * Cout)   # lane layout w*Cout + co

    kernel = functools.partial(_deconv_relu_up_kernel,
                               H=H, W=W, Cin=Cin, Cout=Cout, K=K, TH=TH)

    out = pl.pallas_call(
        kernel,
        out_shape=jax.ShapeDtypeStruct((N, 2, 2, H, W * Cout), jnp.float32),
        grid=(N, T),
        in_specs=[
            # same input block for every H-tile of a batch element -> fetched once
            pl.BlockSpec((1, Cin, H, W), lambda n, t: (n, 0, 0, 0)),
            pl.BlockSpec((K, Cin * W, W * Cout), lambda n, t: (0, 0, 0)),
            pl.BlockSpec((1, W * Cout), lambda n, t: (0, 0)),
        ],
        out_specs=pl.BlockSpec((1, 2, 2, TH, W * Cout),
                               lambda n, t: (n, 0, 0, t, 0)),
        scratch_shapes=[pltpu.VMEM((H + 2, Cin * W), jnp.float32)],
        compiler_params=pltpu.CompilerParams(
            dimension_semantics=("parallel", "arbitrary"),
            vmem_limit_bytes=32 * 1024 * 1024),
    )(x_nchw, w_mat, b_row)

    # Phase-major -> NCHW (2H, 2W): pure transpose/reshape glue.
    y = out.reshape(N, 2, 2, H, W, Cout)
    y = jnp.transpose(y, (0, 5, 3, 1, 4, 2))          # (N, Cout, H, 2, W, 2)
    return y.reshape(N, Cout, 2 * H, 2 * W)


def reference_forward(x_nchw, w_deconv, bias):
    """Pure-JAX reference (lax conv) of the same forward pass."""
    x = jnp.transpose(x_nchw, (0, 2, 3, 1))
    w_conv = jnp.transpose(w_deconv[:, :, ::-1, ::-1], (2, 3, 0, 1))
    y = jax.lax.conv_general_dilated(
        x, w_conv, window_strides=(1, 1), padding=[(1, 1), (1, 1)],
        dimension_numbers=('NHWC', 'HWIO', 'NHWC'))
    y = jax.nn.relu(y + bias)
    y = jnp.repeat(jnp.repeat(y, 2, axis=1), 2, axis=2)
    return jnp.transpose(y, (0, 3, 1, 2))


if __name__ == "__main__":
    key = jax.random.PRNGKey(0)
    k_x, k_w, k_b = jax.random.split(key, 3)

    N, Cin, Cout, H, W, K = 2, 4, 8, 16, 16, 3

    x = jax.random.normal(k_x, (N, Cin, H, W), dtype=jnp.float32)
    # ConvTranspose2d weight layout: (Cin, Cout, K, K).
    w_deconv = 0.1 * jax.random.normal(k_w, (Cin, Cout, K, K), dtype=jnp.float32)
    bias = 0.1 * jax.random.normal(k_b, (Cout,), dtype=jnp.float32)

    out = jax.block_until_ready(deconv_layer_forward(x, w_deconv, bias))
    ref = jax.block_until_ready(reference_forward(x, w_deconv, bias))

    assert out.shape == (N, Cout, 2 * H, 2 * W), out.shape
    assert jnp.allclose(out, ref, atol=1e-4, rtol=1e-4), "mismatch vs reference"

    print("KERNEL_OK")
</pallas_src>

<mosaic_0001>
module attributes {stable_mosaic.version = 11 : i64} {
  func.func @_deconv_relu_up_kernel(%arg0: i32, %arg1: i32, %arg2: memref<1x4x16x16xf32, #tpu.memory_space<vmem>>, %arg3: memref<3x64x128xf32, #tpu.memory_space<vmem>>, %arg4: memref<1x128xf32, #tpu.memory_space<vmem>>, %arg5: memref<1x2x2x8x128xf32, #tpu.memory_space<vmem>>, %arg6: memref<18x64xf32, #tpu.memory_space<vmem>>) attributes {dimension_semantics = [#tpu.dimension_semantics<parallel>, #tpu.dimension_semantics<arbitrary>], iteration_bounds = array<i64: 2, 2>, scalar_prefetch = 0 : i64, scratch_operands = 1 : i64, tpu.core_type = #tpu.core_type<tc>, window_params = [{transform_indices = @transform_0, window_bounds = array<i64: 1, 4, 16, 16>}, {pipeline_mode = #tpu.pipeline_mode<synchronous>, transform_indices = @transform_1, window_bounds = array<i64: 3, 64, 128>}, {pipeline_mode = #tpu.pipeline_mode<synchronous>, transform_indices = @transform_2, window_bounds = array<i64: 1, 128>}, {transform_indices = @transform_3, window_bounds = array<i64: 1, 2, 2, 8, 128>}]} {
    %c0_i32 = arith.constant 0 : i32
    %0 = arith.cmpi eq, %arg1, %c0_i32 : i32
    %1 = arith.extui %0 : i1 to i32
    %c0_i32_0 = arith.constant 0 : i32
    %2 = arith.cmpi ne, %1, %c0_i32_0 : i32
    scf.if %2 {
      %cst_37 = arith.constant 0.000000e+00 : f32
      %44 = vector.broadcast %cst_37 : f32 to vector<18x64xf32>
      %c0_38 = arith.constant 0 : index
      %c0_39 = arith.constant 0 : index
      %45 = vector.load %arg6[%c0_38, %c0_39] : memref<18x64xf32, #tpu.memory_space<vmem>>, vector<18x64xf32>
      tpu.vector_store %arg6[%c0_38, %c0_39], %44 {strides = array<i32>} : memref<18x64xf32, #tpu.memory_space<vmem>>, vector<18x64xf32>,
      %c0_40 = arith.constant 0 : index
      %c0_41 = arith.constant 0 : index
      %c0_42 = arith.constant 0 : index
      %c0_43 = arith.constant 0 : index
      %46 = vector.load %arg2[%c0_40, %c0_41, %c0_42, %c0_43] : memref<1x4x16x16xf32, #tpu.memory_space<vmem>>, vector<1x1x16x16xf32>
      %47 = vector.shape_cast %46 : vector<1x1x16x16xf32> to vector<16x16xf32>
      %c1_44 = arith.constant 1 : index
      %c0_45 = arith.constant 0 : index
      %48 = vector.load %arg6[%c1_44, %c0_45] : memref<18x64xf32, #tpu.memory_space<vmem>>, vector<16x16xf32>
      tpu.vector_store %arg6[%c1_44, %c0_45], %47 {strides = array<i32>} : memref<18x64xf32, #tpu.memory_space<vmem>>, vector<16x16xf32>,
      %c0_46 = arith.constant 0 : index
      %c1_47 = arith.constant 1 : index
      %c0_48 = arith.constant 0 : index
      %c0_49 = arith.constant 0 : index
      %49 = vector.load %arg2[%c0_46, %c1_47, %c0_48, %c0_49] : memref<1x4x16x16xf32, #tpu.memory_space<vmem>>, vector<1x1x16x16xf32>
      %50 = vector.shape_cast %49 : vector<1x1x16x16xf32> to vector<16x16xf32>
      %c1_50 = arith.constant 1 : index
      %c16 = arith.constant 16 : index
      %51 = vector.load %arg6[%c1_50, %c16] : memref<18x64xf32, #tpu.memory_space<vmem>>, vector<16x16xf32>
      tpu.vector_store %arg6[%c1_50, %c16], %50 {strides = array<i32>} : memref<18x64xf32, #tpu.memory_space<vmem>>, vector<16x16xf32>,
      %c0_51 = arith.constant 0 : index
      %c2_52 = arith.constant 2 : index
      %c0_53 = arith.constant 0 : index
      %c0_54 = arith.constant 0 : index
      %52 = vector.load %arg2[%c0_51, %c2_52, %c0_53, %c0_54] : memref<1x4x16x16xf32, #tpu.memory_space<vmem>>, vector<1x1x16x16xf32>
      %53 = vector.shape_cast %52 : vector<1x1x16x16xf32> to vector<16x16xf32>
      %c1_55 = arith.constant 1 : index
      %c32 = arith.constant 32 : index
      %54 = vector.load %arg6[%c1_55, %c32] : memref<18x64xf32, #tpu.memory_space<vmem>>, vector<16x16xf32>
      tpu.vector_store %arg6[%c1_55, %c32], %53 {strides = array<i32>} : memref<18x64xf32, #tpu.memory_space<vmem>>, vector<16x16xf32>,
      %c0_56 = arith.constant 0 : index
      %c3 = arith.constant 3 : index
      %c0_57 = arith.constant 0 : index
      %c0_58 = arith.constant 0 : index
      %55 = vector.load %arg2[%c0_56, %c3, %c0_57, %c0_58] : memref<1x4x16x16xf32, #tpu.memory_space<vmem>>, vector<1x1x16x16xf32>
      %56 = vector.shape_cast %55 : vector<1x1x16x16xf32> to vector<16x16xf32>
      %c1_59 = arith.constant 1 : index
      %c48 = arith.constant 48 : index
      %57 = vector.load %arg6[%c1_59, %c48] : memref<18x64xf32, #tpu.memory_space<vmem>>, vector<16x16xf32>
      tpu.vector_store %arg6[%c1_59, %c48], %56 {strides = array<i32>} : memref<18x64xf32, #tpu.memory_space<vmem>>, vector<16x16xf32>,
    } else {
    }
    %c8_i32 = arith.constant 8 : i32
    %3 = arith.muli %arg1, %c8_i32 : i32
    %4 = tpu.assume_multiple %3, 8 : i32
    %cst = arith.constant 0.000000e+00 : f32
    %5 = vector.broadcast %cst : f32 to vector<8x128xf32>
    %c0_i32_1 = arith.constant 0 : i32
    %6 = arith.addi %4, %c0_i32_1 : i32
    %7 = arith.index_cast %6 : i32 to index
    %c0 = arith.constant 0 : index
    %8 = vector.load %arg6[%7, %c0] : memref<18x64xf32, #tpu.memory_space<vmem>>, vector<8x64xf32>
    %c0_2 = arith.constant 0 : index
    %c0_3 = arith.constant 0 : index
    %c0_4 = arith.constant 0 : index
    %9 = vector.load %arg3[%c0_2, %c0_3, %c0_4] : memref<3x64x128xf32, #tpu.memory_space<vmem>>, vector<1x64x128xf32>
    %10 = vector.shape_cast %9 : vector<1x64x128xf32> to vector<64x128xf32>
    %cst_5 = arith.constant dense<0.000000e+00> : vector<8x128xf32>
    %11 = tpu.matmul %8, %10, %cst_5 {dimension_numbers = #tpu.dot_dimension_numbers<[1], [0], [0], [1], [0, 0, 1, 1], [], []>} : vector<8x64xf32>, vector<64x128xf32>, vector<8x128xf32> -> vector<8x128xf32>
    %12 = arith.addf %5, %11 : vector<8x128xf32>
    %c1_i32 = arith.constant 1 : i32
    %13 = arith.addi %4, %c1_i32 : i32
    %14 = arith.index_cast %13 : i32 to index
    %c0_6 = arith.constant 0 : index
    %15 = vector.load %arg6[%14, %c0_6] : memref<18x64xf32, #tpu.memory_space<vmem>>, vector<8x64xf32>
    %c1 = arith.constant 1 : index
    %c0_7 = arith.constant 0 : index
    %c0_8 = arith.constant 0 : index
    %16 = vector.load %arg3[%c1, %c0_7, %c0_8] : memref<3x64x128xf32, #tpu.memory_space<vmem>>, vector<1x64x128xf32>
    %17 = vector.shape_cast %16 : vector<1x64x128xf32> to vector<64x128xf32>
    %cst_9 = arith.constant dense<0.000000e+00> : vector<8x128xf32>
    %18 = tpu.matmul %15, %17, %cst_9 {dimension_numbers = #tpu.dot_dimension_numbers<[1], [0], [0], [1], [0, 0, 1, 1], [], []>} : vector<8x64xf32>, vector<64x128xf32>, vector<8x128xf32> -> vector<8x128xf32>
    %19 = arith.addf %12, %18 : vector<8x128xf32>
    %c2_i32 = arith.constant 2 : i32
    %20 = arith.addi %4, %c2_i32 : i32
    %21 = arith.index_cast %20 : i32 to index
    %c0_10 = arith.constant 0 : index
    %22 = vector.load %arg6[%21, %c0_10] : memref<18x64xf32, #tpu.memory_space<vmem>>, vector<8x64xf32>
    %c2 = arith.constant 2 : index
    %c0_11 = arith.constant 0 : index
    %c0_12 = arith.constant 0 : index
    %23 = vector.load %arg3[%c2, %c0_11, %c0_12] : memref<3x64x128xf32, #tpu.memory_space<vmem>>, vector<1x64x128xf32>
    %24 = vector.shape_cast %23 : vector<1x64x128xf32> to vector<64x128xf32>
    %cst_13 = arith.constant dense<0.000000e+00> : vector<8x128xf32>
    %25 = tpu.matmul %22, %24, %cst_13 {dimension_numbers = #tpu.dot_dimension_numbers<[1], [0], [0], [1], [0, 0, 1, 1], [], []>} : vector<8x64xf32>, vector<64x128xf32>, vector<8x128xf32> -> vector<8x128xf32>
    %26 = arith.addf %19, %25 : vector<8x128xf32>
    %c0_14 = arith.constant 0 : index
    %c0_15 = arith.constant 0 : index
    %27 = vector.load %arg4[%c0_14, %c0_15] : memref<1x128xf32, #tpu.memory_space<vmem>>, vector<1x128xf32>
    %28 = vector.broadcast %27 : vector<1x128xf32> to vector<8x128xf32>
    %29 = arith.addf %26, %28 : vector<8x128xf32>
    %cst_16 = arith.constant 0.000000e+00 : f32
    %30 = vector.broadcast %cst_16 : f32 to vector<8x128xf32>
    %31 = arith.maximumf %29, %30 : vector<8x128xf32>
    %c0_17 = arith.constant 0 : index
    %c0_18 = arith.constant 0 : index
    %c0_19 = arith.constant 0 : index
    %c0_20 = arith.constant 0 : index
    %c0_21 = arith.constant 0 : index
    %32 = vector.load %arg5[%c0_17, %c0_18, %c0_19, %c0_20, %c0_21] : memref<1x2x2x8x128xf32, #tpu.memory_space<vmem>>, vector<1x1x1x8x128xf32>
    %33 = vector.shape_cast %32 : vector<1x1x1x8x128xf32> to vector<8x128xf32>
    %34 = vector.shape_cast %31 : vector<8x128xf32> to vector<1x1x1x8x128xf32>
    tpu.vector_store %arg5[%c0_17, %c0_18, %c0_19, %c0_20, %c0_21], %34 {strides = array<i32>} : memref<1x2x2x8x128xf32, #tpu.memory_space<vmem>>, vector<1x1x1x8x128xf32>,
    %c0_22 = arith.constant 0 : index
    %c0_23 = arith.constant 0 : index
    %c1_24 = arith.constant 1 : index
    %c0_25 = arith.constant 0 : index
    %c0_26 = arith.constant 0 : index
    %35 = vector.load %arg5[%c0_22, %c0_23, %c1_24, %c0_25, %c0_26] : memref<1x2x2x8x128xf32, #tpu.memory_space<vmem>>, vector<1x1x1x8x128xf32>
    %36 = vector.shape_cast %35 : vector<1x1x1x8x128xf32> to vector<8x128xf32>
    %37 = vector.shape_cast %31 : vector<8x128xf32> to vector<1x1x1x8x128xf32>
    tpu.vector_store %arg5[%c0_22, %c0_23, %c1_24, %c0_25, %c0_26], %37 {strides = array<i32>} : memref<1x2x2x8x128xf32, #tpu.memory_space<vmem>>, vector<1x1x1x8x128xf32>,
    %c0_27 = arith.constant 0 : index
    %c1_28 = arith.constant 1 : index
    %c0_29 = arith.constant 0 : index
    %c0_30 = arith.constant 0 : index
    %c0_31 = arith.constant 0 : index
    %38 = vector.load %arg5[%c0_27, %c1_28, %c0_29, %c0_30, %c0_31] : memref<1x2x2x8x128xf32, #tpu.memory_space<vmem>>, vector<1x1x1x8x128xf32>
    %39 = vector.shape_cast %38 : vector<1x1x1x8x128xf32> to vector<8x128xf32>
    %40 = vector.shape_cast %31 : vector<8x128xf32> to vector<1x1x1x8x128xf32>
    tpu.vector_store %arg5[%c0_27, %c1_28, %c0_29, %c0_30, %c0_31], %40 {strides = array<i32>} : memref<1x2x2x8x128xf32, #tpu.memory_space<vmem>>, vector<1x1x1x8x128xf32>,
    %c0_32 = arith.constant 0 : index
    %c1_33 = arith.constant 1 : index
    %c1_34 = arith.constant 1 : index
    %c0_35 = arith.constant 0 : index
    %c0_36 = arith.constant 0 : index
    %41 = vector.load %arg5[%c0_32, %c1_33, %c1_34, %c0_35, %c0_36] : memref<1x2x2x8x128xf32, #tpu.memory_space<vmem>>, vector<1x1x1x8x128xf32>
    %42 = vector.shape_cast %41 : vector<1x1x1x8x128xf32> to vector<8x128xf32>
    %43 = vector.shape_cast %31 : vector<8x128xf32> to vector<1x1x1x8x128xf32>
    tpu.vector_store %arg5[%c0_32, %c1_33, %c1_34, %c0_35, %c0_36], %43 {strides = array<i32>} : memref<1x2x2x8x128xf32, #tpu.memory_space<vmem>>, vector<1x1x1x8x128xf32>,
    return
  }
  func.func @transform_0(%arg0: i32, %arg1: i32) -> (i32, i32, i32, i32) {
    %c0_i32 = arith.constant 0 : i32
    %c0_i32_0 = arith.constant 0 : i32
    %c0_i32_1 = arith.constant 0 : i32
    %c0_i32_2 = arith.constant 0 : i32
    return %arg0, %c0_i32, %c0_i32_0, %c0_i32_1 : i32, i32, i32, i32
  }
  func.func @transform_1(%arg0: i32, %arg1: i32) -> (i32, i32, i32) {
    %c0_i32 = arith.constant 0 : i32
    %c0_i32_0 = arith.constant 0 : i32
    %c0_i32_1 = arith.constant 0 : i32
    %c0_i32_2 = arith.constant 0 : i32
    return %c0_i32, %c0_i32_0, %c0_i32_1 : i32, i32, i32
  }
  func.func @transform_2(%arg0: i32, %arg1: i32) -> (i32, i32) {
    %c0_i32 = arith.constant 0 : i32
    %c0_i32_0 = arith.constant 0 : i32
    %c0_i32_1 = arith.constant 0 : i32
    return %c0_i32, %c0_i32_0 : i32, i32
  }
  func.func @transform_3(%arg0: i32, %arg1: i32) -> (i32, i32, i32, i32, i32) {
    %c0_i32 = arith.constant 0 : i32
    %c0_i32_0 = arith.constant 0 : i32
    %c0_i32_1 = arith.constant 0 : i32
    %c0_i32_2 = arith.constant 0 : i32
    return %arg0, %c0_i32, %c0_i32_0, %arg1, %c0_i32_1 : i32, i32, i32, i32, i32
  }
}

</mosaic_0001>

<llo_original>
// kernel: tpu_custom_call.1
$region0: #{tpu_custom_call.1}
  #allocation0 [shape = 'u32[]', space=smem, size = 0x4, offset = 0x4, fixed_abs, tag = 'smem constant byte address 0x4 - core index']
  #allocation1 [shape = 'u32[72,128]{1,0:T(1,128)}', space=vmem, size = 0x9000, scoped, tag = 'internal scratch']
  #allocation2 [shape = 'f32[18,64]{1,0:T(8,128)}', space=vmem, size = 0x3000, scoped, tag = 'scratch operand']
  %s0 = inlined_call_operand.hbm [shape: f32[2,4,16,16], index: 0, kind: input, shape index: {}]
  %s1 = inlined_call_operand.hbm [shape: f32[3,64,128], index: 1, kind: input, shape index: {}]
  %s2 = inlined_call_operand.vmem [shape: f32[1,128], index: 2, kind: input, shape index: {}]
  %s3 = inlined_call_operand.hbm [shape: f32[2,2,2,16,128], index: 3, kind: output, shape index: {}]
  %s4 = sld [smem:[#allocation0]]
  $region57: #{tpu_custom_call.1} parent=0
    _
  %s6 = ssub.s32 1, %s4
  %s7 = scalar_select 0, %s6, %s4
  $region1: #{tpu_custom_call.1} parent=0
    #allocation3 [shape = 'u8[65536]{0}', space=vmem, size = 0x10000, scoped, tag = 'input window, operand 0']
    #allocation4 [shape = 's32[2]{0}', space=sflag, size = 0x8, scoped, tag = 'scoped memory for tpu_custom_call.1']
    #allocation5 [shape = 's32[2]{0}', space=sflag, size = 0x8, scoped, tag = 'scoped memory for tpu_custom_call.1']
    #allocation6 [shape = 'u8[98304]{0}', space=vmem, size = 0x18000, scoped, tag = 'input window, operand 1, single buffered']
    #allocation7 [shape = 's32[1]{0}', space=sflag, size = 0x4, scoped, tag = 'scoped memory for tpu_custom_call.1']
    #allocation8 [shape = 'u8[32768]{0}', space=vmem, size = 0x8000, scoped, tag = 'output window, operand 0']
    %8 = vsyncpa [#allocation4], 0
    %s9 = scalar_lea.sflag [#allocation4], 1
    %10 = vsyncpa %s9, 0
    %11 = vsyncpa [#allocation7], 0
    %12 = vsyncpa [#allocation5], 0
    %s13 = scalar_lea.sflag [#allocation5], 1
    %14 = vsyncpa %s13, 0
    loop: start=0, step=1, limit=6
    $region2: #{tpu_custom_call.1} parent=1 // loop_pre_header
      _
    $region3: #{tpu_custom_call.1} parent=1 // loop_header
      %s16 = sphi 0, %s20
      %p17 = scmp.ge.s32.totalorder %s16, 6
      %s23 = sphi 0, %s35
      %s24 = sphi 0, %s31
      %s25 = sphi 0, %s23
      %s26 = sphi 0, %s24
      %s27 = sphi 0, %s25
      %s28 = sphi 0, %s26
      %s38 = sphi 0, %s40
      %s41 = sphi 0, %s38
      %s42 = sphi 0, %s41
      %s58 = sphi 0, %s42
      %s62 = sphi 0, %s62
      %s64 = sphi 0, %s62
      %s65 = sphi 0, %s64
      %s79 = sphi 0, %s65
      %s83 = sphi 0, %s83
      %s85 = sphi 0, %s83
      %s86 = sphi 0, %s85
      %s100 = sphi 0, %s86
      %s108 = sphi 0, %s110
      %s111 = sphi 0, %s108
      %s112 = sphi 0, %s111
      %s128 = sphi 0, %s112
    $region4: #{tpu_custom_call.1} parent=1 // loop_header_branch
      %19 = sbr.rel (%p17) target = $region8
    $region5: #{tpu_custom_call.1} parent=1 // loop_body
      %s21 = ssub.s32 %s16, 1
      %s22 = ssub.s32 %s16, 2
      %s29 = sadd.s32 1, %s24
      %p30 = scmp.ge.s32.totalorder %s29, 2
      %s31 = scalar_select %p30, 0, %s29
      %s32 = sadd.s32 1, %s23
      %s33 = scalar_select %p30, %s32, %s23
      %p34 = scmp.ge.s32.totalorder %s33, 2
      %s35 = scalar_select %p34, 0, %s33
      %s36 = ssub.s32 %s23, %s35
      %p37 = scmp.eq.s32.totalorder %s36, 0
      %s39 = sadd.s32 %s38, 1
      %s40 = scalar_select %p37, %s38, %s39
      %p43 = pneg %p37
      %p44 = scmp.eq.s32.totalorder %s16, 3
      %p45 = por %p43, %p44
      %p46 = scmp.ne.s32.totalorder %s38, %s41
      %p47 = scmp.eq.s32.totalorder %s16, 0
      %p48 = por %p46, %p47
      %p49 = scmp.ne.s32.totalorder %s38, %s41
      %p50 = scmp.eq.s32.totalorder %s21, 3
      %p51 = por %p49, %p50
      %p52 = scmp.ne.s32.totalorder %s41, %s42
      %p53 = scmp.eq.s32.totalorder %s21, 0
      %p54 = por %p52, %p53
      %p55 = scmp.ne.s32.totalorder %s41, %s42
      %p56 = scmp.eq.s32.totalorder %s22, 3
      %p57 = por %p55, %p56
      %p59 = scmp.ne.s32.totalorder %s42, %s58
      %p60 = scmp.eq.s32.totalorder %s22, 0
      %p61 = por %p59, %p60
      %s63 = sadd.s32 %s62, 1
      %p66 = scmp.eq.s32.totalorder %s16, 3
      %p67 = scmp.ne.s32.totalorder %s62, %s64
      %p68 = scmp.eq.s32.totalorder %s16, 0
      %p69 = por %p67, %p68
      %p70 = scmp.ne.s32.totalorder %s62, %s64
      %p71 = scmp.eq.s32.totalorder %s21, 3
      %p72 = por %p70, %p71
      %p73 = scmp.ne.s32.totalorder %s64, %s65
      %p74 = scmp.eq.s32.totalorder %s21, 0
      %p75 = por %p73, %p74
      %p76 = scmp.ne.s32.totalorder %s64, %s65
      %p77 = scmp.eq.s32.totalorder %s22, 3
      %p78 = por %p76, %p77
      %p80 = scmp.ne.s32.totalorder %s65, %s79
      %p81 = scmp.eq.s32.totalorder %s22, 0
      %p82 = por %p80, %p81
      %s84 = sadd.s32 %s83, 1
      %p87 = scmp.eq.s32.totalorder %s16, 3
      %p88 = scmp.ne.s32.totalorder %s83, %s85
      %p89 = scmp.eq.s32.totalorder %s16, 0
      %p90 = por %p88, %p89
      %p91 = scmp.ne.s32.totalorder %s83, %s85
      %p92 = scmp.eq.s32.totalorder %s21, 3
      %p93 = por %p91, %p92
      %p94 = scmp.ne.s32.totalorder %s85, %s86
      %p95 = scmp.eq.s32.totalorder %s21, 0
      %p96 = por %p94, %p95
      %p97 = scmp.ne.s32.totalorder %s85, %s86
      %p98 = scmp.eq.s32.totalorder %s22, 3
      %p99 = por %p97, %p98
      %p101 = scmp.ne.s32.totalorder %s86, %s100
      %p102 = scmp.eq.s32.totalorder %s22, 0
      %p103 = por %p101, %p102
      %s104 = ssub.s32 %s23, %s35
      %s105 = ssub.s32 %s24, %s31
      %s106 = sor.u32 %s104, %s105
      %p107 = scmp.eq.s32.totalorder %s106, 0
      %s109 = sadd.s32 %s108, 1
      %s110 = scalar_select %p107, %s108, %s109
      %p113 = pneg %p107
      %p114 = scmp.eq.s32.totalorder %s16, 3
      %p115 = por %p113, %p114
      %p116 = scmp.ne.s32.totalorder %s108, %s111
      %p117 = scmp.eq.s32.totalorder %s16, 0
      %p118 = por %p116, %p117
      %p119 = scmp.ne.s32.totalorder %s108, %s111
      %p120 = scmp.eq.s32.totalorder %s21, 3
      %p121 = por %p119, %p120
      %p122 = scmp.ne.s32.totalorder %s111, %s112
      %p123 = scmp.eq.s32.totalorder %s21, 0
      %p124 = por %p122, %p123
      %p125 = scmp.ne.s32.totalorder %s111, %s112
      %p126 = scmp.eq.s32.totalorder %s22, 3
      %p127 = por %p125, %p126
      %p129 = scmp.ne.s32.totalorder %s112, %s128
      %p130 = scmp.eq.s32.totalorder %s22, 0
      %p131 = por %p129, %p130
      %p132 = scmp.le.s32.totalorder 1, %s16
      %p133 = scmp.lt.s32.totalorder %s16, 5
      %p134 = pnand %p132, %p133
      %p135 = pneg %p134
      // Predicated region
      $region9: #{tpu_custom_call.1} parent=5 // pred_check
        _
      $region10: #{tpu_custom_call.1} parent=5 // pred_check_branch
        %137 = sbr.rel (%p134) target = $region12
      $region11: #{tpu_custom_call.1} parent=5 // pred_region
        %s138 = ssub.s32 %s16, 1
        // Predicated region
        $region13: #{tpu_custom_call.1} parent=11 // pred_check
          %p139 = pneg %p75
        $region14: #{tpu_custom_call.1} parent=11 // pred_check_branch
          %141 = sbr.rel (%p139) target = $region16
        $region15: #{tpu_custom_call.1} parent=11 // pred_region
          %143 = vsyncadd [#allocation7], 0
          %s144 = sshll.u32 %s1, 4
          %s145 = int_to_ptr.hbm [resolvable:$true] %s144
          %s146 = sshll.u32 [#allocation6], 4
          %s147 = int_to_ptr.vmem [resolvable:$true] %s146
          %152 = dma.hbm_to_vmem [thread:$0]  %s145, 3072, %s147, [#allocation7], 128, 128, 8
        $region16: #{tpu_custom_call.1} parent=11 // pred_fallthru
          _
        // Predicated region
        $region17: #{tpu_custom_call.1} parent=11 // pred_check
          %p153 = pneg %p96
        $region18: #{tpu_custom_call.1} parent=11 // pred_check_branch
          %155 = sbr.rel (%p153) target = $region20
        $region19: #{tpu_custom_call.1} parent=11 // pred_region
          _
        $region20: #{tpu_custom_call.1} parent=11 // pred_fallthru
          _
      $region12: #{tpu_custom_call.1} parent=5 // pred_fallthru
        _
      %p156 = scmp.lt.s32.totalorder %s16, 4
      // Predicated region
      $region21: #{tpu_custom_call.1} parent=5 // pred_check
        %p157 = pneg %p156
      $region22: #{tpu_custom_call.1} parent=5 // pred_check_branch
        %159 = sbr.rel (%p157) target = $region24
      $region23: #{tpu_custom_call.1} parent=5 // pred_region
        // Predicated region
        $region25: #{tpu_custom_call.1} parent=23 // pred_check
          %p160 = pneg %p48
        $region26: #{tpu_custom_call.1} parent=23 // pred_check_branch
          %162 = sbr.rel (%p160) target = $region28
        $region27: #{tpu_custom_call.1} parent=23 // pred_region
          %s163 = sand.u32 %s38, 1
          %s164 = scalar_lea.sflag [#allocation4], %s163
          %s165 = sand.u32 %s38, 1
          %s166 = smul.addr %s165, 64
          %s167 = scalar_lea.vmem [#allocation3], %s166
          %169 = vsyncadd %s164, 0
          %s170 = smul.addr %s23, 8
          %s171 = smul.addr %s170, 8
          %s172 = scalar_lea.hbm %s0, %s171
          %s173 = sshll.u32 %s172, 4
          %s174 = int_to_ptr.hbm [resolvable:$true] %s173
          %s175 = sshll.u32 %s167, 4
          %s176 = int_to_ptr.vmem [resolvable:$true] %s175
          %181 = dma.hbm_to_vmem [thread:$0]  %s174, 1024, %s176, %s164, 128, 128, 8
        $region28: #{tpu_custom_call.1} parent=23 // pred_fallthru
          _
      $region24: #{tpu_custom_call.1} parent=5 // pred_fallthru
        _
      %p182 = scmp.le.s32.totalorder 1, %s16
      %p183 = scmp.lt.s32.totalorder %s16, 5
      %p184 = pnand %p182, %p183
      %p185 = pneg %p184
      // Predicated region
      $region29: #{tpu_custom_call.1} parent=5 // pred_check
        _
      $region30: #{tpu_custom_call.1} parent=5 // pred_check_branch
        %187 = sbr.rel (%p184) target = $region32
      $region31: #{tpu_custom_call.1} parent=5 // pred_region
        %s188 = ssub.s32 %s16, 1
        %s189 = sand.u32 %s41, 1
        %s190 = scalar_lea.sflag [#allocation4], %s189
        %s191 = sand.u32 %s41, 1
        %s192 = smul.addr %s191, 64
        %s193 = scalar_lea.vmem [#allocation3], %s192
        // Predicated region
        $region33: #{tpu_custom_call.1} parent=31 // pred_check
          %p194 = pneg %p54
        $region34: #{tpu_custom_call.1} parent=31 // pred_check_branch
          %196 = sbr.rel (%p194) target = $region36
        $region35: #{tpu_custom_call.1} parent=31 // pred_region
          %198 = dma.done %s190, 1024
        $region36: #{tpu_custom_call.1} parent=31 // pred_fallthru
          _
        // Predicated region
        $region37: #{tpu_custom_call.1} parent=31 // pred_check
          %p199 = pneg %p75
        $region38: #{tpu_custom_call.1} parent=31 // pred_check_branch
          %201 = sbr.rel (%p199) target = $region40
        $region39: #{tpu_custom_call.1} parent=31 // pred_region
          %203 = dma.done [#allocation7], 3072
        $region40: #{tpu_custom_call.1} parent=31 // pred_fallthru
          _
        %s204 = sand.u32 %s41, 1
        %s205 = scalar_lea.sflag [#allocation4], %s204
        %s206 = sand.u32 %s41, 1
        %s207 = smul.addr %s206, 64
        %s208 = scalar_lea.vmem [#allocation3], %s207
        %p209 = pneg %p54
        %p210 = pneg %p51
        %p211 = pneg %p75
        %p212 = pneg %p72
        %p213 = pneg %p96
        %p214 = pneg %p93
        %p215 = pneg %p124
        %p216 = pneg %p121
        %s217 = sand.u32 %s111, 1
        %s218 = scalar_lea.sflag [#allocation5], %s217
        %s219 = sand.u32 %s111, 1
        %s220 = smul.addr %s219, 32
        %s221 = scalar_lea.vmem [#allocation8], %s220
        %p222 = scmp.eq.s32.totalorder %s26, 0
        // Predicated region
        $region41: #{tpu_custom_call.1} parent=31 // pred_check
          %p223 = pneg %p222
        $region42: #{tpu_custom_call.1} parent=31 // pred_check_branch
          %225 = sbr.rel (%p223) target = $region44
        $region43: #{tpu_custom_call.1} parent=31 // pred_region
          %vm226 = vcmask 523264
          %227 = vst.msk [vmem:[#allocation2] sm:$0xff] %vm226, 0.0
          %228 = vst.msk [vmem:[#allocation2 + $0x8] sm:$0xff] %vm226, 0.0
          %vm229 = vcmask 517120
          %230 = vst.msk [vmem:[#allocation2 + $0x10] sm:$0x3] %vm229, 0.0
          %v231 = vld [vmem:[%s193] sm:$0xff]
          %v232 = vld [vmem:[%s193 + $0x8] sm:$0xff]
          %vm233 = vcmask 130048
          %234 = vst.msk [vmem:[#allocation2 + $0x1] sm:$0xff] %vm233, %v231
          %235 = vst.msk [vmem:[#allocation2 + $0x9] sm:$0xff] %vm233, %v232
          %s236 = scalar_lea.vmem %s193, 16 [#allocation3]
          %v237 = vld [vmem:[%s236] sm:$0xff]
          %v238 = vld [vmem:[%s236 + $0x8] sm:$0xff]
          %241 = vrot.lane.b32.xlu0 %v237, 16
          %v242 = vpop.permute.xlu0 %241
          %243 = vrot.lane.b32.xlu0 %v238, 16
          %v244 = vpop.permute.xlu0 %243
          %vm247 = vcmask 261248
          %248 = vst.msk [vmem:[#allocation2 + $0x1] sm:$0xff] %vm247, %v242
          %249 = vst.msk [vmem:[#allocation2 + $0x9] sm:$0xff] %vm247, %v244
          %s250 = scalar_lea.vmem %s193, 32 [#allocation3]
          %v251 = vld [vmem:[%s250] sm:$0xff]
          %v252 = vld [vmem:[%s250 + $0x8] sm:$0xff]
          %255 = vrot.lane.b32.xlu0 %v251, 32
          %v256 = vpop.permute.xlu0 %255
          %257 = vrot.lane.b32.xlu0 %v252, 32
          %v258 = vpop.permute.xlu0 %257
          %vm261 = vcmask 392448
          %262 = vst.msk [vmem:[#allocation2 + $0x1] sm:$0xff] %vm261, %v256
          %263 = vst.msk [vmem:[#allocation2 + $0x9] sm:$0xff] %vm261, %v258
          %s264 = scalar_lea.vmem %s193, 48 [#allocation3]
          %v265 = vld [vmem:[%s264] sm:$0xff]
          %v266 = vld [vmem:[%s264 + $0x8] sm:$0xff]
          %269 = vrot.lane.b32.xlu0 %v265, 48
          %v270 = vpop.permute.xlu0 %269
          %271 = vrot.lane.b32.xlu0 %v266, 48
          %v272 = vpop.permute.xlu0 %271
          %vm275 = vcmask 523648
          %276 = vst.msk [vmem:[#allocation2 + $0x1] sm:$0xff] %vm275, %v270
          %277 = vst.msk [vmem:[#allocation2 + $0x9] sm:$0xff] %vm275, %v272
        $region44: #{tpu_custom_call.1} parent=31 // pred_fallthru
          _
        %s278 = smul.u32 %s26, 8
        %s279 = scalar_lea.vmem [#allocation2], %s278
        %v280 = vld [vmem:[%s279] sm:$0xff]
        %v281 = vld [vmem:[#allocation6] sm:$0xff]
        %v282 = vld [vmem:[#allocation6 + $0x8] sm:$0xff]
        %v283 = vld [vmem:[#allocation6 + $0x10] sm:$0xff]
        %v284 = vld [vmem:[#allocation6 + $0x18] sm:$0xff]
        %v285 = vld [vmem:[#allocation6 + $0x20] sm:$0xff]
        %v286 = vld [vmem:[#allocation6 + $0x28] sm:$0xff]
        %v287 = vld [vmem:[#allocation6 + $0x30] sm:$0xff]
        %v288 = vld [vmem:[#allocation6 + $0x38] sm:$0xff]
        %s289 = sadd.s32 %s278, 1
        %s290 = scalar_lea.vmem [#allocation2], %s289
        %v291 = vld [vmem:[%s290] sm:$0xff]
        %s292 = scalar_lea.vmem [#allocation6], 64
        %v293 = vld [vmem:[%s292] sm:$0xff]
        %v294 = vld [vmem:[%s292 + $0x8] sm:$0xff]
        %v295 = vld [vmem:[%s292 + $0x10] sm:$0xff]
        %v296 = vld [vmem:[%s292 + $0x18] sm:$0xff]
        %v297 = vld [vmem:[%s292 + $0x20] sm:$0xff]
        %v298 = vld [vmem:[%s292 + $0x28] sm:$0xff]
        %v299 = vld [vmem:[%s292 + $0x30] sm:$0xff]
        %v300 = vld [vmem:[%s292 + $0x38] sm:$0xff]
        %vm301 = vcmask 523264
        %v303 = vsel %vm301, %v291, 0
        %305 = vmatpush.msra.mxu0 0.0
        %306 = vmatpush.msra.mxu0 0.0
        %307 = vmatpush.msra.mxu0 0.0
        %308 = vmatpush.msra.mxu0 0.0
        %309 = vmatpush.msra.mxu0 0.0
        %310 = vmatpush.msra.mxu0 0.0
        %311 = vmatpush.msra.mxu0 0.0
        %312 = vmatpush.msra.mxu0 0.0
        %313 = vmatpush.msra.mxu0 %v300
        %314 = vmatpush.msra.mxu0 %v299
        %315 = vmatpush.msra.mxu0 %v298
        %316 = vmatpush.msra.mxu0 %v297
        %317 = vmatpush.msra.mxu0 %v296
        %318 = vmatpush.msra.mxu0 %v295
        %319 = vmatpush.msra.mxu0 %v294
        %320 = vmatpush.msra.mxu0 %v293
        %321 = vmatmul.f32.gmra.mxu0 %v303
        %v322 = vpop.f32.mrf.mxu0
        %v323 = vadd.f32 0.0, %v322
        %324 = vdwg.mxu0
        %v326 = vsel %vm301, %v280, 0
        %328 = vmatpush.msra.mxu0 0.0
        %329 = vmatpush.msra.mxu0 0.0
        %330 = vmatpush.msra.mxu0 0.0
        %331 = vmatpush.msra.mxu0 0.0
        %332 = vmatpush.msra.mxu0 0.0
        %333 = vmatpush.msra.mxu0 0.0
        %334 = vmatpush.msra.mxu0 0.0
        %335 = vmatpush.msra.mxu0 0.0
        %336 = vmatpush.msra.mxu0 %v288
        %337 = vmatpush.msra.mxu0 %v287
        %338 = vmatpush.msra.mxu0 %v286
        %339 = vmatpush.msra.mxu0 %v285
        %340 = vmatpush.msra.mxu0 %v284
        %341 = vmatpush.msra.mxu0 %v283
        %342 = vmatpush.msra.mxu0 %v282
        %343 = vmatpush.msra.mxu0 %v281
        %344 = vmatmul.f32.gmra.mxu0 %v326
        %v345 = vpop.f32.mrf.mxu0
        %v346 = vadd.f32 %v323, %v345
        %347 = vdwg.mxu0
        %s348 = sadd.s32 %s278, 2
        %s349 = scalar_lea.vmem [#allocation2], %s348
        %v350 = vld [vmem:[%s349] sm:$0xff]
        %s351 = scalar_lea.vmem [#allocation6], 128
        %v352 = vld [vmem:[%s351] sm:$0xff]
        %v353 = vld [vmem:[%s351 + $0x8] sm:$0xff]
        %v354 = vld [vmem:[%s351 + $0x10] sm:$0xff]
        %v355 = vld [vmem:[%s351 + $0x18] sm:$0xff]
        %v356 = vld [vmem:[%s351 + $0x20] sm:$0xff]
        %v357 = vld [vmem:[%s351 + $0x28] sm:$0xff]
        %v358 = vld [vmem:[%s351 + $0x30] sm:$0xff]
        %v359 = vld [vmem:[%s351 + $0x38] sm:$0xff]
        %v361 = vsel %vm301, %v350, 0
        %363 = vmatpush.msra.mxu0 0.0
        %364 = vmatpush.msra.mxu0 0.0
        %365 = vmatpush.msra.mxu0 0.0
        %366 = vmatpush.msra.mxu0 0.0
        %367 = vmatpush.msra.mxu0 0.0
        %368 = vmatpush.msra.mxu0 0.0
        %369 = vmatpush.msra.mxu0 0.0
        %370 = vmatpush.msra.mxu0 0.0
        %371 = vmatpush.msra.mxu0 %v359
        %372 = vmatpush.msra.mxu0 %v358
        %373 = vmatpush.msra.mxu0 %v357
        %374 = vmatpush.msra.mxu0 %v356
        %375 = vmatpush.msra.mxu0 %v355
        %376 = vmatpush.msra.mxu0 %v354
        %377 = vmatpush.msra.mxu0 %v353
        %378 = vmatpush.msra.mxu0 %v352
        %379 = vmatmul.f32.gmra.mxu0 %v361
        %v380 = vpop.f32.mrf.mxu0
        %v381 = vadd.f32 0.0, %v380
        %382 = vdwg.mxu0
        %v383 = vadd.f32 %v346, %v381
        %v384 = vld [vmem:[%s2] sm:$0x1]
        %v386 = vperm.slane %v384, 0
        %v388 = vadd.f32 %v383, %v386
        %v389 = vmax.f32 %v388, 0.0
        %390 = vst [vmem:[%s221] sm:$0xff] %v389
        %s391 = scalar_lea.vmem %s221, 8 [#allocation8]
        %392 = vst [vmem:[%s391] sm:$0xff] %v389
        %s393 = scalar_lea.vmem %s221, 16 [#allocation8]
        %394 = vst [vmem:[%s393] sm:$0xff] %v389
        %s395 = scalar_lea.vmem %s221, 24 [#allocation8]
        %396 = vst [vmem:[%s395] sm:$0xff] %v389
        %s397 = sand.u32 %s111, 1
        %s398 = scalar_lea.sflag [#allocation5], %s397
        %s399 = sand.u32 %s111, 1
        %s400 = smul.addr %s399, 32
        %s401 = scalar_lea.vmem [#allocation8], %s400
        // Predicated region
        $region45: #{tpu_custom_call.1} parent=31 // pred_check
          %p402 = pneg %p121
        $region46: #{tpu_custom_call.1} parent=31 // pred_check_branch
          %404 = sbr.rel (%p402) target = $region48
        $region47: #{tpu_custom_call.1} parent=31 // pred_region
          %406 = vsyncadd %s398, 0
          %s407 = smul.addr %s25, 8
          %s408 = sadd.s32 %s26, %s407
          %s409 = smul.addr %s408, 8
          %s410 = scalar_lea.hbm %s3, %s409
          %s411 = sshll.u32 %s401, 4
          %s412 = int_to_ptr.vmem [resolvable:$true] %s411
          %s413 = sshll.u32 %s410, 4
          %s414 = int_to_ptr.hbm [resolvable:$true] %s413
          %419 = dma.vmem_to_hbm [thread:$0]  %s412, 512, %s414, %s398, 128, 256, 8
        $region48: #{tpu_custom_call.1} parent=31 // pred_fallthru
          _
      $region32: #{tpu_custom_call.1} parent=5 // pred_fallthru
        _
      %p420 = scmp.le.s32.totalorder 2, %s16
      // Predicated region
      $region49: #{tpu_custom_call.1} parent=5 // pred_check
        %p421 = pneg %p420
      $region50: #{tpu_custom_call.1} parent=5 // pred_check_branch
        %423 = sbr.rel (%p421) target = $region52
      $region51: #{tpu_custom_call.1} parent=5 // pred_region
        %s424 = ssub.s32 %s16, 2
        // Predicated region
        $region53: #{tpu_custom_call.1} parent=51 // pred_check
          %p425 = pneg %p127
        $region54: #{tpu_custom_call.1} parent=51 // pred_check_branch
          %427 = sbr.rel (%p425) target = $region56
        $region55: #{tpu_custom_call.1} parent=51 // pred_region
          %s428 = sand.u32 %s112, 1
          %s429 = scalar_lea.sflag [#allocation5], %s428
          %s430 = sand.u32 %s112, 1
          %s431 = smul.addr %s430, 32
          %s432 = scalar_lea.vmem [#allocation8], %s431
          %434 = dma.done %s429, 512
        $region56: #{tpu_custom_call.1} parent=51 // pred_fallthru
          _
      $region52: #{tpu_custom_call.1} parent=5 // pred_fallthru
        _
    $region6: #{tpu_custom_call.1} parent=1 // loop_footer
      %s20 = sadd.s32 1, %s16
    $region7: #{tpu_custom_call.1} parent=1 // loop_footer_branch
      %15 = sbr.rel target = $region3
    $region8: #{tpu_custom_call.1} parent=1 // loop_exit
      _
    %435 = vsyncpa [#allocation4], 1
    %s436 = scalar_lea.sflag [#allocation4], 1
    %437 = vsyncpa %s436, 1
    %438 = vsyncpa [#allocation7], 1
    %439 = vsyncpa [#allocation5], 1
    %s440 = scalar_lea.sflag [#allocation5], 1
    %441 = vsyncpa %s440, 1

</llo_original>
